<compile_context>
chip_gen: v5e
topology: v5e:2x2
jax: 0.10.0
libtpu: 0.0.40
codegen_flags: <defaults>
</compile_context>

<pallas_src>
import functools

import jax
import jax.numpy as jnp
from jax.experimental import pallas as pl
from jax.experimental.pallas import tpu as pltpu


def _round_up(x, m):
    return -(-x // m) * m


def _pick_tile_l(seq_len, k_pad):
    # Lane-dense tiles only (multiples of 128); cap so the (k_pad, tile_l) f32
    # intermediates stay small enough for v7x's 64 MiB VMEM.
    seq_128 = _round_up(seq_len, 128)
    for cand in (512, 256, 128):
        if cand <= seq_128 and cand * k_pad * 4 <= (8 << 20):
            return cand
    return 128


def _vq_kernel(z_ref, e_ref, et_ref, e2_ref, zqt_ref, idx_ref, sq_ref, *, seq_len):
    """One (batch b, seq-tile j) grid step.

    z_ref   : (1, tile_l, D)   activations (native dtype)
    e_ref   : (K_pad, D)       codebook (VMEM resident)
    et_ref  : (D, K_pad)       codebook transposed (VMEM resident)
    e2_ref  : (K_pad, 1)       ||E_k||^2 in f32 (1e30 for padded codes)
    zqt_ref : (1, D, tile_l)   quantized output, already 'b e l' layout
    idx_ref : (1, 1, tile_l)   argmin codebook indices (int32), lane-dense
    sq_ref  : (1, 1, 128)      per-tile sum of squared quantization error
    """
    k_pad = e_ref.shape[0]
    tile_l = z_ref.shape[1]

    z = z_ref[0]                                    # (tile_l, D), native dtype
    e = e_ref[...]                                  # (K_pad, D)
    e2 = e2_ref[...]                                # (K_pad, 1) f32

    # Cross term on the MXU, transposed layout: codes on sublanes, tokens on lanes.
    cross_t = jnp.einsum("kd,td->kt", e, z,
                         preferred_element_type=jnp.float32)       # (K_pad, tile_l)
    # argmin_k ||z - e_k||^2 == argmin_k (||e_k||^2 - 2 z.e_k)   (||z||^2 dropped)
    dist_t = e2 - 2.0 * cross_t                                    # (K_pad, tile_l)

    # argmin over the codebook (sublane) axis, first index on ties.
    min_d = jnp.min(dist_t, axis=0, keepdims=True)                 # (1, tile_l)
    code = jax.lax.broadcasted_iota(jnp.int32, dist_t.shape, 0)    # (K_pad, tile_l)
    idx_row = jnp.min(jnp.where(dist_t == min_d, code, k_pad),
                      axis=0, keepdims=True).astype(jnp.int32)     # (1, tile_l)
    idx_ref[0] = idx_row

    # Validity mask along the token (lane) axis: seq padding contributes nothing.
    lane = jax.lax.broadcasted_iota(jnp.int32, (1, tile_l), 1)
    valid = ((pl.program_id(1) * tile_l + lane) < seq_len).astype(jnp.float32)

    # One-hot gather of the selected code vectors (MXU), produced already
    # transposed so the output tile is (D, tile_l) == final 'b e l' layout.
    onehot_t = jnp.where(code == idx_row, valid, 0.0).astype(et_ref.dtype)
    z_q_t = jnp.dot(et_ref[...], onehot_t,
                    preferred_element_type=jnp.float32)            # (D, tile_l)
    zqt_ref[0] = z_q_t.astype(zqt_ref.dtype)

    # sum_t ||z_t - e_{idx_t}||^2 = sum_t (||z_t||^2 + min_d_t); padded z rows are 0.
    zf = z.astype(jnp.float32)
    sq_tile = jnp.sum(zf * zf) + jnp.sum(min_d * valid)
    lane128 = jax.lax.broadcasted_iota(jnp.int32, (1, 1, 128), 2)
    sq_ref[...] = jnp.where(lane128 == 0, sq_tile, 0.0)


@functools.partial(jax.jit, static_argnames=("beta", "kld_scale"))
def vector_quantize(z_e, embed_w, *, beta=0.25, kld_scale=10.0):
    """z_e: (batch, seq_len, embed_dim); embed_w: (num_embed, embed_dim).

    Returns (z_q in 'b e l' layout, diff, z_q_idx (b, l)) -- forward values only.
    """
    bs, seq_len, d = z_e.shape
    k = embed_w.shape[0]

    # Pad the codebook axis to a lane multiple; padded codes get a huge norm so
    # they are never selected.  Pad the sequence axis to a tile multiple.
    # TODO(synk): for very large codebooks (K >~ 8K) add a K grid axis carrying a
    #             running (min, argmin) instead of materializing (tile_l, K) dist.
    k_pad = _round_up(k, 128)
    tile_l = _pick_tile_l(seq_len, k_pad)
    l_pad = _round_up(seq_len, tile_l)
    n_tiles_l = l_pad // tile_l

    z_p = jnp.pad(z_e, ((0, 0), (0, l_pad - seq_len), (0, 0)))
    e_p = jnp.pad(embed_w, ((0, k_pad - k), (0, 0)))
    e_t = e_p.T                                                     # (d, k_pad)
    e2 = jnp.sum(embed_w.astype(jnp.float32) ** 2, axis=1)
    e2_p = jnp.concatenate(
        [e2, jnp.full((k_pad - k,), 1e30, jnp.float32)])[:, None]   # (k_pad, 1)

    kernel = functools.partial(_vq_kernel, seq_len=seq_len)

    zqt, idx3, sq = pl.pallas_call(
        kernel,
        grid=(bs, n_tiles_l),
        in_specs=[
            pl.BlockSpec((1, tile_l, d), lambda b, j: (b, j, 0)),   # activations
            pl.BlockSpec((k_pad, d), lambda b, j: (0, 0)),          # codebook (resident)
            pl.BlockSpec((d, k_pad), lambda b, j: (0, 0)),          # codebook^T (resident)
            pl.BlockSpec((k_pad, 1), lambda b, j: (0, 0)),          # ||E||^2 (resident)
        ],
        out_specs=(
            pl.BlockSpec((1, d, tile_l), lambda b, j: (b, 0, j)),   # z_q in 'b e l'
            pl.BlockSpec((1, 1, tile_l), lambda b, j: (b, 0, j)),   # indices (lane-dense)
            pl.BlockSpec((1, 1, 128), lambda b, j: (b, 0, j)),      # per-tile sq error
        ),
        out_shape=(
            jax.ShapeDtypeStruct((bs, d, l_pad), z_e.dtype),
            jax.ShapeDtypeStruct((bs, 1, l_pad), jnp.int32),
            jax.ShapeDtypeStruct((bs, 1, n_tiles_l * 128), jnp.float32),
        ),
        compiler_params=pltpu.CompilerParams(
            dimension_semantics=("parallel", "parallel"),
            vmem_limit_bytes=32 * 1024 * 1024,
        ),
    )(z_p, e_p, e_t, e2_p)

    z_q_out = zqt[:, :, :seq_len]                   # (bs, embed_dim, seq_len)
    z_q_idx = idx3[:, 0, :seq_len]                  # (bs, seq_len)

    mse = jnp.sum(sq) / (bs * seq_len * d)
    # Forward values of (z_q.detach()-z_e)^2 and (z_q - z_e.detach())^2 coincide.
    diff = (kld_scale * (1.0 + beta)) * mse
    return z_q_out, diff, z_q_idx


def _reference(z_e, embed_w, beta=0.25, kld_scale=10.0):
    bs, seq_len, d = z_e.shape
    flat = z_e.reshape(-1, d)
    dist = (jnp.sum(flat ** 2, axis=1, keepdims=True)
            - 2.0 * flat @ embed_w.T
            + jnp.sum(embed_w ** 2, axis=1, keepdims=True).T)
    idx = jnp.argmin(dist, axis=1).reshape(bs, seq_len)
    z_q = embed_w[idx]
    mse = jnp.mean((z_q - z_e) ** 2)
    diff = kld_scale * (mse + beta * mse)
    return jnp.transpose(z_q, (0, 2, 1)), diff, idx


if __name__ == "__main__":
    # args: embed_dim=32, num_embed=64, beta=0.25 (kld_scale fixed at 10.0)
    batch, seq_len, embed_dim, num_embed = 2, 8, 32, 64
    beta, kld_scale = 0.25, 10.0

    key = jax.random.PRNGKey(0)
    key_z, key_e = jax.random.split(key)
    z_e = jax.random.normal(key_z, (batch, seq_len, embed_dim), dtype=jnp.float32)
    embed_w = jax.random.normal(key_e, (num_embed, embed_dim), dtype=jnp.float32)

    z_q, diff, z_q_idx = vector_quantize(z_e, embed_w, beta=beta, kld_scale=kld_scale)
    jax.block_until_ready((z_q, diff, z_q_idx))

    # sanity-check against a pure-JAX reference of the PyTorch forward
    z_q_ref, diff_ref, idx_expected = _reference(z_e, embed_w, beta, kld_scale)
    assert z_q.shape == (batch, embed_dim, seq_len)
    assert z_q_idx.shape == (batch, seq_len)
    assert jnp.allclose(z_q, z_q_ref, atol=1e-5)
    assert jnp.allclose(diff, diff_ref, rtol=1e-4, atol=1e-4)
    assert jnp.array_equal(z_q_idx, idx_expected)

    print("KERNEL_OK")
</pallas_src>

<mosaic_0001>
module attributes {stable_mosaic.version = 11 : i64} {
  func.func @_vq_kernel(%arg0: i32, %arg1: i32, %arg2: memref<1x128x32xf32, #tpu.memory_space<vmem>>, %arg3: memref<128x32xf32, #tpu.memory_space<vmem>>, %arg4: memref<32x128xf32, #tpu.memory_space<vmem>>, %arg5: memref<128x1xf32, #tpu.memory_space<vmem>>, %arg6: memref<1x32x128xf32, #tpu.memory_space<vmem>>, %arg7: memref<1x1x128xi32, #tpu.memory_space<vmem>>, %arg8: memref<1x1x128xf32, #tpu.memory_space<vmem>>) attributes {dimension_semantics = [#tpu.dimension_semantics<parallel>, #tpu.dimension_semantics<parallel>], iteration_bounds = array<i64: 2, 1>, scalar_prefetch = 0 : i64, scratch_operands = 0 : i64, tpu.core_type = #tpu.core_type<tc>, window_params = [{transform_indices = @transform_0, window_bounds = array<i64: 1, 128, 32>}, {pipeline_mode = #tpu.pipeline_mode<synchronous>, transform_indices = @transform_1, window_bounds = array<i64: 128, 32>}, {pipeline_mode = #tpu.pipeline_mode<synchronous>, transform_indices = @transform_2, window_bounds = array<i64: 32, 128>}, {pipeline_mode = #tpu.pipeline_mode<synchronous>, transform_indices = @transform_3, window_bounds = array<i64: 128, 1>}, {transform_indices = @transform_4, window_bounds = array<i64: 1, 32, 128>}, {transform_indices = @transform_5, window_bounds = array<i64: 1, 1, 128>}, {transform_indices = @transform_6, window_bounds = array<i64: 1, 1, 128>}]} {
    %c0 = arith.constant 0 : index
    %c0_0 = arith.constant 0 : index
    %c0_1 = arith.constant 0 : index
    %0 = vector.load %arg2[%c0, %c0_0, %c0_1] : memref<1x128x32xf32, #tpu.memory_space<vmem>>, vector<1x128x32xf32>
    %1 = vector.shape_cast %0 : vector<1x128x32xf32> to vector<128x32xf32>
    %c0_2 = arith.constant 0 : index
    %c0_3 = arith.constant 0 : index
    %2 = vector.load %arg3[%c0_2, %c0_3] : memref<128x32xf32, #tpu.memory_space<vmem>>, vector<128x32xf32>
    %c0_4 = arith.constant 0 : index
    %c0_5 = arith.constant 0 : index
    %3 = vector.load %arg5[%c0_4, %c0_5] : memref<128x1xf32, #tpu.memory_space<vmem>>, vector<128x1xf32>
    "tpu.trace_start"() <{level = 10 : i32, message = "kd,td->kt"}> : () -> ()
    %cst = arith.constant dense<0.000000e+00> : vector<128x128xf32>
    %4 = tpu.matmul %2, %1, %cst {dimension_numbers = #tpu.dot_dimension_numbers<[1], [1], [0], [0], [0, 0, 1, 0], [], []>} : vector<128x32xf32>, vector<128x32xf32>, vector<128x128xf32> -> vector<128x128xf32>
    "tpu.trace_stop"() : () -> ()
    %cst_6 = arith.constant 2.000000e+00 : f32
    %5 = vector.broadcast %cst_6 : f32 to vector<128x128xf32>
    %6 = arith.mulf %5, %4 : vector<128x128xf32>
    %7 = vector.broadcast %3 : vector<128x1xf32> to vector<128x128xf32>
    %8 = arith.subf %7, %6 : vector<128x128xf32>
    %cst_7 = arith.constant dense<0x7F800000> : vector<128xf32>
    %9 = vector.multi_reduction <minimumf>, %8, %cst_7 [0] : vector<128x128xf32> to vector<128xf32>
    %10 = vector.shape_cast %9 : vector<128xf32> to vector<1x128xf32>
    %11 = tpu.iota {dimensions = array<i32: 0>} : vector<128x128xi32>
    %12 = vector.broadcast %10 : vector<1x128xf32> to vector<128x128xf32>
    %13 = arith.cmpf oeq, %8, %12 : vector<128x128xf32>
    %c128_i32 = arith.constant 128 : i32
    %14 = vector.broadcast %c128_i32 : i32 to vector<128x128xi32>
    %15 = arith.select %13, %11, %14 : vector<128x128xi1>, vector<128x128xi32>
    %cst_8 = arith.constant dense<2147483647> : vector<128xi32>
    %16 = vector.multi_reduction <minsi>, %15, %cst_8 [0] : vector<128x128xi32> to vector<128xi32>
    %17 = vector.shape_cast %16 : vector<128xi32> to vector<1x128xi32>
    %c0_9 = arith.constant 0 : index
    %c0_10 = arith.constant 0 : index
    %c0_11 = arith.constant 0 : index
    %18 = vector.load %arg7[%c0_9, %c0_10, %c0_11] : memref<1x1x128xi32, #tpu.memory_space<vmem>>, vector<1x1x128xi32>
    %19 = vector.shape_cast %18 : vector<1x1x128xi32> to vector<1x128xi32>
    %20 = vector.shape_cast %17 : vector<1x128xi32> to vector<1x1x128xi32>
    tpu.vector_store %arg7[%c0_9, %c0_10, %c0_11], %20 {strides = array<i32>} : memref<1x1x128xi32, #tpu.memory_space<vmem>>, vector<1x1x128xi32>,
    %21 = tpu.iota {dimensions = array<i32: 1>} : vector<1x128xi32>
    %c128_i32_12 = arith.constant 128 : i32
    %22 = arith.muli %arg1, %c128_i32_12 : i32
    %23 = vector.broadcast %22 : i32 to vector<1x128xi32>
    %24 = arith.addi %23, %21 : vector<1x128xi32>
    %c8_i32 = arith.constant 8 : i32
    %25 = vector.broadcast %c8_i32 : i32 to vector<1x128xi32>
    %26 = arith.cmpi slt, %24, %25 : vector<1x128xi32>
    %27 = arith.extui %26 : vector<1x128xi1> to vector<1x128xi32>
    %28 = arith.sitofp %27 : vector<1x128xi32> to vector<1x128xf32>
    %29 = vector.broadcast %17 : vector<1x128xi32> to vector<128x128xi32>
    %30 = arith.cmpi eq, %11, %29 : vector<128x128xi32>
    %cst_13 = arith.constant 0.000000e+00 : f32
    %31 = vector.shape_cast %28 : vector<1x128xf32> to vector<1x128xf32>
    %32 = vector.broadcast %31 : vector<1x128xf32> to vector<128x128xf32>
    %33 = vector.broadcast %cst_13 : f32 to vector<128x128xf32>
    %34 = arith.select %30, %32, %33 : vector<128x128xi1>, vector<128x128xf32>
    %c0_14 = arith.constant 0 : index
    %c0_15 = arith.constant 0 : index
    %35 = vector.load %arg4[%c0_14, %c0_15] : memref<32x128xf32, #tpu.memory_space<vmem>>, vector<32x128xf32>
    %cst_16 = arith.constant dense<0.000000e+00> : vector<32x128xf32>
    %36 = tpu.matmul %35, %34, %cst_16 {dimension_numbers = #tpu.dot_dimension_numbers<[1], [0], [0], [1], [0, 0, 1, 1], [], []>} : vector<32x128xf32>, vector<128x128xf32>, vector<32x128xf32> -> vector<32x128xf32>
    %c0_17 = arith.constant 0 : index
    %c0_18 = arith.constant 0 : index
    %c0_19 = arith.constant 0 : index
    %37 = vector.load %arg6[%c0_17, %c0_18, %c0_19] : memref<1x32x128xf32, #tpu.memory_space<vmem>>, vector<1x32x128xf32>
    %38 = vector.shape_cast %37 : vector<1x32x128xf32> to vector<32x128xf32>
    %39 = vector.shape_cast %36 : vector<32x128xf32> to vector<1x32x128xf32>
    tpu.vector_store %arg6[%c0_17, %c0_18, %c0_19], %39 {strides = array<i32>} : memref<1x32x128xf32, #tpu.memory_space<vmem>>, vector<1x32x128xf32>,
    %40 = arith.mulf %1, %1 : vector<128x32xf32>
    %41 = vector.shape_cast %40 : vector<128x32xf32> to vector<1x128x32xf32>
    %cst_20 = arith.constant dense<0.000000e+00> : vector<1xf32>
    %42 = vector.multi_reduction <add>, %41, %cst_20 [1, 2] : vector<1x128x32xf32> to vector<1xf32>
    %43 = vector.shape_cast %42 : vector<1xf32> to vector<1x1x1xf32>
    %44 = vector.extract %43[0, 0, 0] : f32 from vector<1x1x1xf32>
    %45 = arith.mulf %10, %28 : vector<1x128xf32>
    %46 = vector.shape_cast %45 : vector<1x128xf32> to vector<1x1x128xf32>
    %cst_21 = arith.constant dense<0.000000e+00> : vector<1xf32>
    %47 = vector.multi_reduction <add>, %46, %cst_21 [1, 2] : vector<1x1x128xf32> to vector<1xf32>
    %48 = vector.shape_cast %47 : vector<1xf32> to vector<1x1x1xf32>
    %49 = vector.extract %48[0, 0, 0] : f32 from vector<1x1x1xf32>
    %50 = arith.addf %44, %49 : f32
    %51 = tpu.iota {dimensions = array<i32: 2>} : vector<1x1x128xi32>
    %c0_i32 = arith.constant 0 : i32
    %52 = vector.broadcast %c0_i32 : i32 to vector<1x1x128xi32>
    %53 = arith.cmpi eq, %51, %52 : vector<1x1x128xi32>
    %cst_22 = arith.constant 0.000000e+00 : f32
    %54 = vector.broadcast %50 : f32 to vector<1x1x128xf32>
    %55 = vector.broadcast %cst_22 : f32 to vector<1x1x128xf32>
    %56 = arith.select %53, %54, %55 : vector<1x1x128xi1>, vector<1x1x128xf32>
    %c0_23 = arith.constant 0 : index
    %c0_24 = arith.constant 0 : index
    %c0_25 = arith.constant 0 : index
    %57 = vector.load %arg8[%c0_23, %c0_24, %c0_25] : memref<1x1x128xf32, #tpu.memory_space<vmem>>, vector<1x1x128xf32>
    tpu.vector_store %arg8[%c0_23, %c0_24, %c0_25], %56 {strides = array<i32>} : memref<1x1x128xf32, #tpu.memory_space<vmem>>, vector<1x1x128xf32>,
    return
  }
  func.func @transform_0(%arg0: i32, %arg1: i32) -> (i32, i32, i32) {
    %c0_i32 = arith.constant 0 : i32
    %c0_i32_0 = arith.constant 0 : i32
    return %arg0, %arg1, %c0_i32 : i32, i32, i32
  }
  func.func @transform_1(%arg0: i32, %arg1: i32) -> (i32, i32) {
    %c0_i32 = arith.constant 0 : i32
    %c0_i32_0 = arith.constant 0 : i32
    %c0_i32_1 = arith.constant 0 : i32
    return %c0_i32, %c0_i32_0 : i32, i32
  }
  func.func @transform_2(%arg0: i32, %arg1: i32) -> (i32, i32) {
    %c0_i32 = arith.constant 0 : i32
    %c0_i32_0 = arith.constant 0 : i32
    %c0_i32_1 = arith.constant 0 : i32
    return %c0_i32, %c0_i32_0 : i32, i32
  }
  func.func @transform_3(%arg0: i32, %arg1: i32) -> (i32, i32) {
    %c0_i32 = arith.constant 0 : i32
    %c0_i32_0 = arith.constant 0 : i32
    %c0_i32_1 = arith.constant 0 : i32
    return %c0_i32, %c0_i32_0 : i32, i32
  }
  func.func @transform_4(%arg0: i32, %arg1: i32) -> (i32, i32, i32) {
    %c0_i32 = arith.constant 0 : i32
    %c0_i32_0 = arith.constant 0 : i32
    return %arg0, %c0_i32, %arg1 : i32, i32, i32
  }
  func.func @transform_5(%arg0: i32, %arg1: i32) -> (i32, i32, i32) {
    %c0_i32 = arith.constant 0 : i32
    %c0_i32_0 = arith.constant 0 : i32
    return %arg0, %c0_i32, %arg1 : i32, i32, i32
  }
  func.func @transform_6(%arg0: i32, %arg1: i32) -> (i32, i32, i32) {
    %c0_i32 = arith.constant 0 : i32
    %c0_i32_0 = arith.constant 0 : i32
    return %arg0, %c0_i32, %arg1 : i32, i32, i32
  }
}

</mosaic_0001>

<llo_original>
// kernel: vector_quantize.1
$region0: #{vector_quantize.1}
  #allocation0 [shape = 'u32[]', space=smem, size = 0x4, offset = 0x4, fixed_abs, tag = 'smem constant byte address 0x4 - core index']
  #allocation1 [shape = 'u32[72,128]{1,0:T(1,128)}', space=vmem, size = 0x9000, scoped, tag = 'internal scratch']
  %s0 = inlined_call_operand.vmem [shape: f32[2,128,32], index: 0, kind: input, shape index: {}]
  %s1 = inlined_call_operand.vmem [shape: f32[128,32], index: 1, kind: input, shape index: {}]
  %s2 = inlined_call_operand.vmem [shape: f32[32,128], index: 2, kind: input, shape index: {}]
  %s3 = inlined_call_operand.vmem [shape: f32[128,1], index: 3, kind: input, shape index: {}]
  %s4 = inlined_call_operand.vmem [shape: f32[2,32,128], index: 4, kind: output, shape index: {0}]
  %s5 = inlined_call_operand.hbm [shape: s32[2,1,128], index: 5, kind: output, shape index: {1}]
  %s6 = inlined_call_operand.vmem [shape: f32[2,1,128], index: 6, kind: output, shape index: {2}]
  %7 = xla_tuple %s4, %s5, %s6
  %s8 = sld [smem:[#allocation0]]
  $region65: #{vector_quantize.1} parent=0
    _
  %s10 = ssub.s32 1, %s8
  %s11 = scalar_select 0, %s10, %s8
  $region1: #{vector_quantize.1} parent=0
    #allocation2 [shape = 'u8[1024]{0}', space=vmem, size = 0x400, scoped, tag = 'output window, operand 1']
    #allocation3 [shape = 's32[2]{0}', space=sflag, size = 0x8, scoped, tag = 'scoped memory for vector_quantize.1']
    %12 = vsyncpa [#allocation3], 0
    %s13 = scalar_lea.sflag [#allocation3], 1
    %14 = vsyncpa %s13, 0
    loop: start=0, step=1, limit=4
    $region2: #{vector_quantize.1} parent=1 // loop_pre_header
      _
    $region3: #{vector_quantize.1} parent=1 // loop_header
      %s16 = sphi 0, %s20
      %p17 = scmp.ge.s32.totalorder %s16, 4
      %s23 = sphi 0, %s35
      %s24 = sphi 0, %s31
      %s25 = sphi 0, %s23
      %s26 = sphi 0, %s24
      %s27 = sphi 0, %s25
      %s28 = sphi 0, %s26
      %s40 = sphi 0, %s42
      %s43 = sphi 0, %s40
      %s44 = sphi 0, %s43
      %s60 = sphi 0, %s44
      %s64 = sphi 0, %s64
      %s66 = sphi 0, %s64
      %s67 = sphi 0, %s66
      %s81 = sphi 0, %s67
      %s85 = sphi 0, %s85
      %s87 = sphi 0, %s85
      %s88 = sphi 0, %s87
      %s102 = sphi 0, %s88
      %s106 = sphi 0, %s106
      %s108 = sphi 0, %s106
      %s109 = sphi 0, %s108
      %s123 = sphi 0, %s109
      %s131 = sphi 0, %s133
      %s134 = sphi 0, %s131
      %s135 = sphi 0, %s134
      %s151 = sphi 0, %s135
      %s159 = sphi 0, %s161
      %s162 = sphi 0, %s159
      %s163 = sphi 0, %s162
      %s179 = sphi 0, %s163
      %s187 = sphi 0, %s189
      %s190 = sphi 0, %s187
      %s191 = sphi 0, %s190
      %s207 = sphi 0, %s191
    $region4: #{vector_quantize.1} parent=1 // loop_header_branch
      %19 = sbr.rel (%p17) target = $region8
    $region5: #{vector_quantize.1} parent=1 // loop_body
      %s21 = ssub.s32 %s16, 1
      %s22 = ssub.s32 %s16, 2
      %s29 = sadd.s32 1, %s24
      %p30 = scmp.ge.s32.totalorder %s29, 1
      %s31 = scalar_select %p30, 0, %s29
      %s32 = sadd.s32 1, %s23
      %s33 = scalar_select %p30, %s32, %s23
      %p34 = scmp.ge.s32.totalorder %s33, 2
      %s35 = scalar_select %p34, 0, %s33
      %s36 = ssub.s32 %s23, %s35
      %s37 = ssub.s32 %s24, %s31
      %s38 = sor.u32 %s36, %s37
      %p39 = scmp.eq.s32.totalorder %s38, 0
      %s41 = sadd.s32 %s40, 1
      %s42 = scalar_select %p39, %s40, %s41
      %p45 = pneg %p39
      %p46 = scmp.eq.s32.totalorder %s16, 1
      %p47 = por %p45, %p46
      %p48 = scmp.ne.s32.totalorder %s40, %s43
      %p49 = scmp.eq.s32.totalorder %s16, 0
      %p50 = por %p48, %p49
      %p51 = scmp.ne.s32.totalorder %s40, %s43
      %p52 = scmp.eq.s32.totalorder %s21, 1
      %p53 = por %p51, %p52
      %p54 = scmp.ne.s32.totalorder %s43, %s44
      %p55 = scmp.eq.s32.totalorder %s21, 0
      %p56 = por %p54, %p55
      %p57 = scmp.ne.s32.totalorder %s43, %s44
      %p58 = scmp.eq.s32.totalorder %s22, 1
      %p59 = por %p57, %p58
      %p61 = scmp.ne.s32.totalorder %s44, %s60
      %p62 = scmp.eq.s32.totalorder %s22, 0
      %p63 = por %p61, %p62
      %s65 = sadd.s32 %s64, 1
      %p68 = scmp.eq.s32.totalorder %s16, 1
      %p69 = scmp.ne.s32.totalorder %s64, %s66
      %p70 = scmp.eq.s32.totalorder %s16, 0
      %p71 = por %p69, %p70
      %p72 = scmp.ne.s32.totalorder %s64, %s66
      %p73 = scmp.eq.s32.totalorder %s21, 1
      %p74 = por %p72, %p73
      %p75 = scmp.ne.s32.totalorder %s66, %s67
      %p76 = scmp.eq.s32.totalorder %s21, 0
      %p77 = por %p75, %p76
      %p78 = scmp.ne.s32.totalorder %s66, %s67
      %p79 = scmp.eq.s32.totalorder %s22, 1
      %p80 = por %p78, %p79
      %p82 = scmp.ne.s32.totalorder %s67, %s81
      %p83 = scmp.eq.s32.totalorder %s22, 0
      %p84 = por %p82, %p83
      %s86 = sadd.s32 %s85, 1
      %p89 = scmp.eq.s32.totalorder %s16, 1
      %p90 = scmp.ne.s32.totalorder %s85, %s87
      %p91 = scmp.eq.s32.totalorder %s16, 0
      %p92 = por %p90, %p91
      %p93 = scmp.ne.s32.totalorder %s85, %s87
      %p94 = scmp.eq.s32.totalorder %s21, 1
      %p95 = por %p93, %p94
      %p96 = scmp.ne.s32.totalorder %s87, %s88
      %p97 = scmp.eq.s32.totalorder %s21, 0
      %p98 = por %p96, %p97
      %p99 = scmp.ne.s32.totalorder %s87, %s88
      %p100 = scmp.eq.s32.totalorder %s22, 1
      %p101 = por %p99, %p100
      %p103 = scmp.ne.s32.totalorder %s88, %s102
      %p104 = scmp.eq.s32.totalorder %s22, 0
      %p105 = por %p103, %p104
      %s107 = sadd.s32 %s106, 1
      %p110 = scmp.eq.s32.totalorder %s16, 1
      %p111 = scmp.ne.s32.totalorder %s106, %s108
      %p112 = scmp.eq.s32.totalorder %s16, 0
      %p113 = por %p111, %p112
      %p114 = scmp.ne.s32.totalorder %s106, %s108
      %p115 = scmp.eq.s32.totalorder %s21, 1
      %p116 = por %p114, %p115
      %p117 = scmp.ne.s32.totalorder %s108, %s109
      %p118 = scmp.eq.s32.totalorder %s21, 0
      %p119 = por %p117, %p118
      %p120 = scmp.ne.s32.totalorder %s108, %s109
      %p121 = scmp.eq.s32.totalorder %s22, 1
      %p122 = por %p120, %p121
      %p124 = scmp.ne.s32.totalorder %s109, %s123
      %p125 = scmp.eq.s32.totalorder %s22, 0
      %p126 = por %p124, %p125
      %s127 = ssub.s32 %s23, %s35
      %s128 = ssub.s32 %s24, %s31
      %s129 = sor.u32 %s127, %s128
      %p130 = scmp.eq.s32.totalorder %s129, 0
      %s132 = sadd.s32 %s131, 1
      %s133 = scalar_select %p130, %s131, %s132
      %p136 = pneg %p130
      %p137 = scmp.eq.s32.totalorder %s16, 1
      %p138 = por %p136, %p137
      %p139 = scmp.ne.s32.totalorder %s131, %s134
      %p140 = scmp.eq.s32.totalorder %s16, 0
      %p141 = por %p139, %p140
      %p142 = scmp.ne.s32.totalorder %s131, %s134
      %p143 = scmp.eq.s32.totalorder %s21, 1
      %p144 = por %p142, %p143
      %p145 = scmp.ne.s32.totalorder %s134, %s135
      %p146 = scmp.eq.s32.totalorder %s21, 0
      %p147 = por %p145, %p146
      %p148 = scmp.ne.s32.totalorder %s134, %s135
      %p149 = scmp.eq.s32.totalorder %s22, 1
      %p150 = por %p148, %p149
      %p152 = scmp.ne.s32.totalorder %s135, %s151
      %p153 = scmp.eq.s32.totalorder %s22, 0
      %p154 = por %p152, %p153
      %s155 = ssub.s32 %s23, %s35
      %s156 = ssub.s32 %s24, %s31
      %s157 = sor.u32 %s155, %s156
      %p158 = scmp.eq.s32.totalorder %s157, 0
      %s160 = sadd.s32 %s159, 1
      %s161 = scalar_select %p158, %s159, %s160
      %p164 = pneg %p158
      %p165 = scmp.eq.s32.totalorder %s16, 1
      %p166 = por %p164, %p165
      %p167 = scmp.ne.s32.totalorder %s159, %s162
      %p168 = scmp.eq.s32.totalorder %s16, 0
      %p169 = por %p167, %p168
      %p170 = scmp.ne.s32.totalorder %s159, %s162
      %p171 = scmp.eq.s32.totalorder %s21, 1
      %p172 = por %p170, %p171
      %p173 = scmp.ne.s32.totalorder %s162, %s163
      %p174 = scmp.eq.s32.totalorder %s21, 0
      %p175 = por %p173, %p174
      %p176 = scmp.ne.s32.totalorder %s162, %s163
      %p177 = scmp.eq.s32.totalorder %s22, 1
      %p178 = por %p176, %p177
      %p180 = scmp.ne.s32.totalorder %s163, %s179
      %p181 = scmp.eq.s32.totalorder %s22, 0
      %p182 = por %p180, %p181
      %s183 = ssub.s32 %s23, %s35
      %s184 = ssub.s32 %s24, %s31
      %s185 = sor.u32 %s183, %s184
      %p186 = scmp.eq.s32.totalorder %s185, 0
      %s188 = sadd.s32 %s187, 1
      %s189 = scalar_select %p186, %s187, %s188
      %p192 = pneg %p186
      %p193 = scmp.eq.s32.totalorder %s16, 1
      %p194 = por %p192, %p193
      %p195 = scmp.ne.s32.totalorder %s187, %s190
      %p196 = scmp.eq.s32.totalorder %s16, 0
      %p197 = por %p195, %p196
      %p198 = scmp.ne.s32.totalorder %s187, %s190
      %p199 = scmp.eq.s32.totalorder %s21, 1
      %p200 = por %p198, %p199
      %p201 = scmp.ne.s32.totalorder %s190, %s191
      %p202 = scmp.eq.s32.totalorder %s21, 0
      %p203 = por %p201, %p202
      %p204 = scmp.ne.s32.totalorder %s190, %s191
      %p205 = scmp.eq.s32.totalorder %s22, 1
      %p206 = por %p204, %p205
      %p208 = scmp.ne.s32.totalorder %s191, %s207
      %p209 = scmp.eq.s32.totalorder %s22, 0
      %p210 = por %p208, %p209
      %p211 = scmp.le.s32.totalorder 1, %s16
      %p212 = scmp.lt.s32.totalorder %s16, 3
      %p213 = pnand %p211, %p212
      %p214 = pneg %p213
      // Predicated region
      $region9: #{vector_quantize.1} parent=5 // pred_check
        _
      $region10: #{vector_quantize.1} parent=5 // pred_check_branch
        %216 = sbr.rel (%p213) target = $region12
      $region11: #{vector_quantize.1} parent=5 // pred_region
        %s217 = ssub.s32 %s16, 1
        // Predicated region
        $region13: #{vector_quantize.1} parent=11 // pred_check
          %p218 = pneg %p77
        $region14: #{vector_quantize.1} parent=11 // pred_check_branch
          %220 = sbr.rel (%p218) target = $region16
        $region15: #{vector_quantize.1} parent=11 // pred_region
          _
        $region16: #{vector_quantize.1} parent=11 // pred_fallthru
          _
        // Predicated region
        $region17: #{vector_quantize.1} parent=11 // pred_check
          %p221 = pneg %p98
        $region18: #{vector_quantize.1} parent=11 // pred_check_branch
          %223 = sbr.rel (%p221) target = $region20
        $region19: #{vector_quantize.1} parent=11 // pred_region
          _
        $region20: #{vector_quantize.1} parent=11 // pred_fallthru
          _
        // Predicated region
        $region21: #{vector_quantize.1} parent=11 // pred_check
          %p224 = pneg %p119
        $region22: #{vector_quantize.1} parent=11 // pred_check_branch
          %226 = sbr.rel (%p224) target = $region24
        $region23: #{vector_quantize.1} parent=11 // pred_region
          _
        $region24: #{vector_quantize.1} parent=11 // pred_fallthru
          _
      $region12: #{vector_quantize.1} parent=5 // pred_fallthru
        _
      %p227 = scmp.lt.s32.totalorder %s16, 2
      // Predicated region
      $region25: #{vector_quantize.1} parent=5 // pred_check
        %p228 = pneg %p227
      $region26: #{vector_quantize.1} parent=5 // pred_check_branch
        %230 = sbr.rel (%p228) target = $region28
      $region27: #{vector_quantize.1} parent=5 // pred_region
        // Predicated region
        $region29: #{vector_quantize.1} parent=27 // pred_check
          %p231 = pneg %p50
        $region30: #{vector_quantize.1} parent=27 // pred_check_branch
          %233 = sbr.rel (%p231) target = $region32
        $region31: #{vector_quantize.1} parent=27 // pred_region
          %s234 = smul.u32 16, %s24
          %p235 = scmp.lt.s32.totalorder %s23, 1
          %s236 = scalar_select %p235, %s23, 1
          %p237 = scmp.lt.s32.totalorder %s234, 15
          %s238 = scalar_select %p237, %s234, 15
          %s239 = smul.addr %s236, 16
          %s240 = sadd.s32 %s238, %s239
          %s241 = smul.addr %s240, 8
          %s242 = scalar_lea.vmem %s0, %s241
          %s243 = smul.u32 16, %s24
        $region32: #{vector_quantize.1} parent=27 // pred_fallthru
          _
      $region28: #{vector_quantize.1} parent=5 // pred_fallthru
        _
      %p244 = scmp.le.s32.totalorder 1, %s16
      %p245 = scmp.lt.s32.totalorder %s16, 3
      %p246 = pnand %p244, %p245
      %p247 = pneg %p246
      // Predicated region
      $region33: #{vector_quantize.1} parent=5 // pred_check
        _
      $region34: #{vector_quantize.1} parent=5 // pred_check_branch
        %249 = sbr.rel (%p246) target = $region36
      $region35: #{vector_quantize.1} parent=5 // pred_region
        %s250 = ssub.s32 %s16, 1
        %s251 = smul.u32 16, %s26
        %p252 = scmp.lt.s32.totalorder %s25, 1
        %s253 = scalar_select %p252, %s25, 1
        %p254 = scmp.lt.s32.totalorder %s251, 15
        %s255 = scalar_select %p254, %s251, 15
        %s256 = smul.addr %s253, 16
        %s257 = sadd.s32 %s255, %s256
        %s258 = smul.addr %s257, 8
        %s259 = scalar_lea.vmem %s0, %s258
        %p260 = pneg %p56
        %p261 = pneg %p53
        %p262 = pneg %p77
        %p263 = pneg %p74
        %p264 = pneg %p98
        %p265 = pneg %p95
        %p266 = pneg %p119
        %p267 = pneg %p116
        %p268 = pneg %p147
        %p269 = pneg %p144
        %p270 = scmp.lt.s32.totalorder %s25, 1
        %s271 = scalar_select %p270, %s25, 1
        %p272 = scmp.lt.s32.totalorder %s26, 0
        %s273 = scalar_select %p272, %s26, 0
        %s274 = smul.addr %s271, 4
        %s275 = sadd.s32 %s273, %s274
        %s276 = smul.addr %s275, 8
        %s277 = scalar_lea.vmem %s4, %s276
        %p278 = pneg %p175
        %p279 = pneg %p172
        %s280 = sand.u32 %s162, 1
        %s281 = scalar_lea.sflag [#allocation3], %s280
        %s282 = sand.u32 %s162, 1
        %s283 = scalar_lea.vmem [#allocation2], %s282
        %p284 = pneg %p203
        %p285 = pneg %p200
        %p286 = scmp.lt.s32.totalorder %s25, 1
        %s287 = scalar_select %p286, %s25, 1
        %p288 = scmp.lt.s32.totalorder %s26, 0
        %s289 = scalar_select %p288, %s26, 0
        %s290 = sadd.s32 %s289, %s287
        %s291 = scalar_lea.vmem %s6, %s290
        %s292 = smul.u32 16, %s26
        %p293 = scmp.lt.s32.totalorder %s25, 1
        %s294 = scalar_select %p293, %s25, 1
        %p295 = scmp.lt.s32.totalorder %s292, 15
        %s296 = scalar_select %p295, %s292, 15
        %s297 = smul.addr %s294, 16
        %s298 = sadd.s32 %s296, %s297
        %s299 = smul.addr %s298, 8
        %s300 = scalar_lea.vmem %s0, %s299
        %s301 = smul.u32 16, %s26
        %p302 = scmp.lt.s32.totalorder %s25, 1
        %s303 = scalar_select %p302, %s25, 1
        %p304 = scmp.lt.s32.totalorder %s26, 0
        %s305 = scalar_select %p304, %s26, 0
        %s306 = smul.addr %s303, 4
        %s307 = sadd.s32 %s305, %s306
        %s308 = smul.addr %s307, 8
        %s309 = scalar_lea.vmem %s4, %s308
        %p310 = scmp.lt.s32.totalorder %s25, 1
        %s311 = scalar_select %p310, %s25, 1
        %p312 = scmp.lt.s32.totalorder %s26, 0
        %s313 = scalar_select %p312, %s26, 0
        %s314 = sadd.s32 %s313, %s311
        %s315 = scalar_lea.vmem %s6, %s314
        %v316 = vld [vmem:[%s300] sm:$0xff]
        %v317 = vld [vmem:[%s300 + $0x8] sm:$0xff]
        %v318 = vld [vmem:[%s300 + $0x10] sm:$0xff]
        %v319 = vld [vmem:[%s300 + $0x18] sm:$0xff]
        %v320 = vld [vmem:[%s300 + $0x20] sm:$0xff]
        %v321 = vld [vmem:[%s300 + $0x28] sm:$0xff]
        %v322 = vld [vmem:[%s300 + $0x30] sm:$0xff]
        %v323 = vld [vmem:[%s300 + $0x38] sm:$0xff]
        %v324 = vld [vmem:[%s300 + $0x40] sm:$0xff]
        %v325 = vld [vmem:[%s300 + $0x48] sm:$0xff]
        %v326 = vld [vmem:[%s300 + $0x50] sm:$0xff]
        %v327 = vld [vmem:[%s300 + $0x58] sm:$0xff]
        %v328 = vld [vmem:[%s300 + $0x60] sm:$0xff]
        %v329 = vld [vmem:[%s300 + $0x68] sm:$0xff]
        %v330 = vld [vmem:[%s300 + $0x70] sm:$0xff]
        %v331 = vld [vmem:[%s300 + $0x78] sm:$0xff]
        %v332 = vld [vmem:[%s1] sm:$0xff]
        %v333 = vld [vmem:[%s1 + $0x8] sm:$0xff]
        %v334 = vld [vmem:[%s1 + $0x10] sm:$0xff]
        %v335 = vld [vmem:[%s1 + $0x18] sm:$0xff]
        %v336 = vld [vmem:[%s1 + $0x20] sm:$0xff]
        %v337 = vld [vmem:[%s1 + $0x28] sm:$0xff]
        %v338 = vld [vmem:[%s1 + $0x30] sm:$0xff]
        %v339 = vld [vmem:[%s1 + $0x38] sm:$0xff]
        %v340 = vld [vmem:[%s1 + $0x40] sm:$0xff]
        %v341 = vld [vmem:[%s1 + $0x48] sm:$0xff]
        %v342 = vld [vmem:[%s1 + $0x50] sm:$0xff]
        %v343 = vld [vmem:[%s1 + $0x58] sm:$0xff]
        %v344 = vld [vmem:[%s1 + $0x60] sm:$0xff]
        %v345 = vld [vmem:[%s1 + $0x68] sm:$0xff]
        %v346 = vld [vmem:[%s1 + $0x70] sm:$0xff]
        %v347 = vld [vmem:[%s1 + $0x78] sm:$0xff]
        %v348 = vld [vmem:[%s3] sm:$0xff]
        %v349 = vld [vmem:[%s3 + $0x8] sm:$0xff]
        %v350 = vld [vmem:[%s3 + $0x10] sm:$0xff]
        %v351 = vld [vmem:[%s3 + $0x18] sm:$0xff]
        %v352 = vld [vmem:[%s3 + $0x20] sm:$0xff]
        %v353 = vld [vmem:[%s3 + $0x28] sm:$0xff]
        %v354 = vld [vmem:[%s3 + $0x30] sm:$0xff]
        %v355 = vld [vmem:[%s3 + $0x38] sm:$0xff]
        %v356 = vld [vmem:[%s3 + $0x40] sm:$0xff]
        %v357 = vld [vmem:[%s3 + $0x48] sm:$0xff]
        %v358 = vld [vmem:[%s3 + $0x50] sm:$0xff]
        %v359 = vld [vmem:[%s3 + $0x58] sm:$0xff]
        %v360 = vld [vmem:[%s3 + $0x60] sm:$0xff]
        %v361 = vld [vmem:[%s3 + $0x68] sm:$0xff]
        %v362 = vld [vmem:[%s3 + $0x70] sm:$0xff]
        %v363 = vld [vmem:[%s3 + $0x78] sm:$0xff]
        %vm364 = vcmask 261120
        %v366 = vsel %vm364, %v332, 0
        %v369 = vsel %vm364, %v333, 0
        %v372 = vsel %vm364, %v334, 0
        %v375 = vsel %vm364, %v335, 0
        %v378 = vsel %vm364, %v336, 0
        %v381 = vsel %vm364, %v337, 0
        %v384 = vsel %vm364, %v338, 0
        %v387 = vsel %vm364, %v339, 0
        %v390 = vsel %vm364, %v340, 0
        %v393 = vsel %vm364, %v341, 0
        %v396 = vsel %vm364, %v342, 0
        %v399 = vsel %vm364, %v343, 0
        %v402 = vsel %vm364, %v344, 0
        %v405 = vsel %vm364, %v345, 0
        %v408 = vsel %vm364, %v346, 0
        %v411 = vsel %vm364, %v347, 0
        %v414 = vsel %vm364, %v316, 0
        %v417 = vsel %vm364, %v317, 0
        %v420 = vsel %vm364, %v318, 0
        %v423 = vsel %vm364, %v319, 0
        %v426 = vsel %vm364, %v320, 0
        %v429 = vsel %vm364, %v321, 0
        %v432 = vsel %vm364, %v322, 0
        %v435 = vsel %vm364, %v323, 0
        %v438 = vsel %vm364, %v324, 0
        %v441 = vsel %vm364, %v325, 0
        %v444 = vsel %vm364, %v326, 0
        %v447 = vsel %vm364, %v327, 0
        %v450 = vsel %vm364, %v328, 0
        %v453 = vsel %vm364, %v329, 0
        %v456 = vsel %vm364, %v330, 0
        %v459 = vsel %vm364, %v331, 0
        %461 = vmatpush.xpose.msra.mxu0 %v459
        %462 = vmatpush.xpose.msra.mxu0 %v456
        %463 = vmatpush.xpose.msra.mxu0 %v453
        %464 = vmatpush.xpose.msra.mxu0 %v450
        %465 = vmatpush.xpose.msra.mxu0 %v447
        %466 = vmatpush.xpose.msra.mxu0 %v444
        %467 = vmatpush.xpose.msra.mxu0 %v441
        %468 = vmatpush.xpose.msra.mxu0 %v438
        %469 = vmatpush.xpose.msra.mxu0 %v435
        %470 = vmatpush.xpose.msra.mxu0 %v432
        %471 = vmatpush.xpose.msra.mxu0 %v429
        %472 = vmatpush.xpose.msra.mxu0 %v426
        %473 = vmatpush.xpose.msra.mxu0 %v423
        %474 = vmatpush.xpose.msra.mxu0 %v420
        %475 = vmatpush.xpose.msra.mxu0 %v417
        %476 = vmatpush.xpose.msra.mxu0 %v414
        %477 = vmatmul.f32.gmra.mxu0 %v366
        %v478 = vpop.f32.mrf.mxu0
        %v479 = vadd.f32 0.0, %v478
        %480 = vmatmul.f32.gmra.mxu0 %v369
        %v481 = vpop.f32.mrf.mxu0
        %v482 = vadd.f32 0.0, %v481
        %483 = vmatmul.f32.gmra.mxu0 %v372
        %v484 = vpop.f32.mrf.mxu0
        %v485 = vadd.f32 0.0, %v484
        %486 = vmatmul.f32.gmra.mxu0 %v375
        %v487 = vpop.f32.mrf.mxu0
        %v488 = vadd.f32 0.0, %v487
        %489 = vmatmul.f32.gmra.mxu0 %v378
        %v490 = vpop.f32.mrf.mxu0
        %v491 = vadd.f32 0.0, %v490
        %492 = vmatmul.f32.gmra.mxu0 %v381
        %v493 = vpop.f32.mrf.mxu0
        %v494 = vadd.f32 0.0, %v493
        %495 = vmatmul.f32.gmra.mxu0 %v384
        %v496 = vpop.f32.mrf.mxu0
        %v497 = vadd.f32 0.0, %v496
        %498 = vmatmul.f32.gmra.mxu0 %v387
        %v499 = vpop.f32.mrf.mxu0
        %v500 = vadd.f32 0.0, %v499
        %501 = vmatmul.f32.gmra.mxu0 %v390
        %v502 = vpop.f32.mrf.mxu0
        %v503 = vadd.f32 0.0, %v502
        %504 = vmatmul.f32.gmra.mxu0 %v393
        %v505 = vpop.f32.mrf.mxu0
        %v506 = vadd.f32 0.0, %v505
        %507 = vmatmul.f32.gmra.mxu0 %v396
        %v508 = vpop.f32.mrf.mxu0
        %v509 = vadd.f32 0.0, %v508
        %510 = vmatmul.f32.gmra.mxu0 %v399
        %v511 = vpop.f32.mrf.mxu0
        %v512 = vadd.f32 0.0, %v511
        %513 = vmatmul.f32.gmra.mxu0 %v402
        %v514 = vpop.f32.mrf.mxu0
        %v515 = vadd.f32 0.0, %v514
        %516 = vmatmul.f32.gmra.mxu0 %v405
        %v517 = vpop.f32.mrf.mxu0
        %v518 = vadd.f32 0.0, %v517
        %519 = vmatmul.f32.gmra.mxu0 %v408
        %v520 = vpop.f32.mrf.mxu0
        %v521 = vadd.f32 0.0, %v520
        %522 = vmatmul.f32.gmra.mxu0 %v411
        %v523 = vpop.f32.mrf.mxu0
        %v524 = vadd.f32 0.0, %v523
        %525 = vdwg.mxu0
        %v526 = vmul.f32 %v479, 2.0
        %v527 = vmul.f32 %v482, 2.0
        %v528 = vmul.f32 %v485, 2.0
        %v529 = vmul.f32 %v488, 2.0
        %v530 = vmul.f32 %v491, 2.0
        %v531 = vmul.f32 %v494, 2.0
        %v532 = vmul.f32 %v497, 2.0
        %v533 = vmul.f32 %v500, 2.0
        %v534 = vmul.f32 %v503, 2.0
        %v535 = vmul.f32 %v506, 2.0
        %v536 = vmul.f32 %v509, 2.0
        %v537 = vmul.f32 %v512, 2.0
        %v538 = vmul.f32 %v515, 2.0
        %v539 = vmul.f32 %v518, 2.0
        %v540 = vmul.f32 %v521, 2.0
        %v541 = vmul.f32 %v524, 2.0
        %543 = vset.pattern.permute.xlu0 0
        %544 = vperm.xlu0 %543, %v348
        %v545 = vpop.permute.xlu0 %544
        %548 = vset.pattern.permute.xlu0 0
        %549 = vperm.xlu0 %548, %v349
        %v550 = vpop.permute.xlu0 %549
        %553 = vset.pattern.permute.xlu0 0
        %554 = vperm.xlu0 %553, %v350
        %v555 = vpop.permute.xlu0 %554
        %558 = vset.pattern.permute.xlu0 0
        %559 = vperm.xlu0 %558, %v351
        %v560 = vpop.permute.xlu0 %559
        %563 = vset.pattern.permute.xlu0 0
        %564 = vperm.xlu0 %563, %v352
        %v565 = vpop.permute.xlu0 %564
        %568 = vset.pattern.permute.xlu0 0
        %569 = vperm.xlu0 %568, %v353
        %v570 = vpop.permute.xlu0 %569
        %573 = vset.pattern.permute.xlu0 0
        %574 = vperm.xlu0 %573, %v354
        %v575 = vpop.permute.xlu0 %574
        %578 = vset.pattern.permute.xlu0 0
        %579 = vperm.xlu0 %578, %v355
        %v580 = vpop.permute.xlu0 %579
        %583 = vset.pattern.permute.xlu0 0
        %584 = vperm.xlu0 %583, %v356
        %v585 = vpop.permute.xlu0 %584
        %588 = vset.pattern.permute.xlu0 0
        %589 = vperm.xlu0 %588, %v357
        %v590 = vpop.permute.xlu0 %589
        %593 = vset.pattern.permute.xlu0 0
        %594 = vperm.xlu0 %593, %v358
        %v595 = vpop.permute.xlu0 %594
        %598 = vset.pattern.permute.xlu0 0
        %599 = vperm.xlu0 %598, %v359
        %v600 = vpop.permute.xlu0 %599
        %603 = vset.pattern.permute.xlu0 0
        %604 = vperm.xlu0 %603, %v360
        %v605 = vpop.permute.xlu0 %604
        %608 = vset.pattern.permute.xlu0 0
        %609 = vperm.xlu0 %608, %v361
        %v610 = vpop.permute.xlu0 %609
        %613 = vset.pattern.permute.xlu0 0
        %614 = vperm.xlu0 %613, %v362
        %v615 = vpop.permute.xlu0 %614
        %618 = vset.pattern.permute.xlu0 0
        %619 = vperm.xlu0 %618, %v363
        %v620 = vpop.permute.xlu0 %619
        %v622 = vsub.f32 %v545, %v526
        %v623 = vsub.f32 %v550, %v527
        %v624 = vsub.f32 %v555, %v528
        %v625 = vsub.f32 %v560, %v529
        %v626 = vsub.f32 %v565, %v530
        %v627 = vsub.f32 %v570, %v531
        %v628 = vsub.f32 %v575, %v532
        %v629 = vsub.f32 %v580, %v533
        %v630 = vsub.f32 %v585, %v534
        %v631 = vsub.f32 %v590, %v535
        %v632 = vsub.f32 %v595, %v536
        %v633 = vsub.f32 %v600, %v537
        %v634 = vsub.f32 %v605, %v538
        %v635 = vsub.f32 %v610, %v539
        %v636 = vsub.f32 %v615, %v540
        %v637 = vsub.f32 %v620, %v541
        %v638 = vmin.f32 %v622, %v626
        %v639 = vmin.f32 %v623, %v627
        %v640 = vmin.f32 %v624, %v628
        %v641 = vmin.f32 %v625, %v629
        %v642 = vmin.f32 %v638, %v630
        %v643 = vmin.f32 %v639, %v631
        %v644 = vmin.f32 %v640, %v632
        %v645 = vmin.f32 %v641, %v633
        %v646 = vmin.f32 %v642, %v634
        %v647 = vmin.f32 %v643, %v635
        %v648 = vmin.f32 %v644, %v636
        %v649 = vmin.f32 %v645, %v637
        %v650 = vmin.f32 %v646, %v647
        %v651 = vmin.f32 %v648, %v649
        %v652 = vmin.f32 %v650, %v651
        %v653 = vrot.slane %v652, 4
        %v654 = vmin.f32 %v652, %v653
        %v655 = vrot.slane %v654, 2
        %v656 = vmin.f32 %v654, %v655
        %v657 = vrot.slane %v656, 1
        %v658 = vmin.f32 %v656, %v657
        %v659 = vlaneseq
        %v660 = vshrl.u32 %v659, 7
        %v661 = vadd.s32 %v660, 8
        %v662 = vadd.s32 %v660, 16
        %v663 = vadd.s32 %v660, 24
        %v664 = vadd.s32 %v660, 32
        %v665 = vadd.s32 %v660, 40
        %v666 = vadd.s32 %v660, 48
        %v667 = vadd.s32 %v660, 56
        %v668 = vadd.s32 %v660, 64
        %v669 = vadd.s32 %v660, 72
        %v670 = vadd.s32 %v660, 80
        %v671 = vadd.s32 %v660, 88
        %v672 = vadd.s32 %v660, 96
        %v673 = vadd.s32 %v660, 104
        %v674 = vadd.s32 %v660, 112
        %v675 = vadd.s32 %v660, 120
        %vm676 = vcmp.eq.f32.partialorder %v622, %v658
        %vm677 = vcmp.eq.f32.partialorder %v623, %v658
        %vm678 = vcmp.eq.f32.partialorder %v624, %v658
        %vm679 = vcmp.eq.f32.partialorder %v625, %v658
        %vm680 = vcmp.eq.f32.partialorder %v626, %v658
        %vm681 = vcmp.eq.f32.partialorder %v627, %v658
        %vm682 = vcmp.eq.f32.partialorder %v628, %v658
        %vm683 = vcmp.eq.f32.partialorder %v629, %v658
        %vm684 = vcmp.eq.f32.partialorder %v630, %v658
        %vm685 = vcmp.eq.f32.partialorder %v631, %v658
        %vm686 = vcmp.eq.f32.partialorder %v632, %v658
        %vm687 = vcmp.eq.f32.partialorder %v633, %v658
        %vm688 = vcmp.eq.f32.partialorder %v634, %v658
        %vm689 = vcmp.eq.f32.partialorder %v635, %v658
        %vm690 = vcmp.eq.f32.partialorder %v636, %v658
        %vm691 = vcmp.eq.f32.partialorder %v637, %v658
        %v692 = vsel %vm676, %v660, 128
        %v693 = vsel %vm677, %v661, 128
        %v694 = vsel %vm678, %v662, 128
        %v695 = vsel %vm679, %v663, 128
        %v696 = vsel %vm680, %v664, 128
        %v697 = vsel %vm681, %v665, 128
        %v698 = vsel %vm682, %v666, 128
        %v699 = vsel %vm683, %v667, 128
        %v700 = vsel %vm684, %v668, 128
        %v701 = vsel %vm685, %v669, 128
        %v702 = vsel %vm686, %v670, 128
        %v703 = vsel %vm687, %v671, 128
        %v704 = vsel %vm688, %v672, 128
        %v705 = vsel %vm689, %v673, 128
        %v706 = vsel %vm690, %v674, 128
        %v707 = vsel %vm691, %v675, 128
        %vm708 = vcmp.lt.s32.totalorder %v692, %v696
        %v709 = vsel %vm708, %v692, %v696
        %vm710 = vcmp.lt.s32.totalorder %v693, %v697
        %v711 = vsel %vm710, %v693, %v697
        %vm712 = vcmp.lt.s32.totalorder %v694, %v698
        %v713 = vsel %vm712, %v694, %v698
        %vm714 = vcmp.lt.s32.totalorder %v695, %v699
        %v715 = vsel %vm714, %v695, %v699
        %vm716 = vcmp.lt.s32.totalorder %v709, %v700
        %v717 = vsel %vm716, %v709, %v700
        %vm718 = vcmp.lt.s32.totalorder %v711, %v701
        %v719 = vsel %vm718, %v711, %v701
        %vm720 = vcmp.lt.s32.totalorder %v713, %v702
        %v721 = vsel %vm720, %v713, %v702
        %vm722 = vcmp.lt.s32.totalorder %v715, %v703
        %v723 = vsel %vm722, %v715, %v703
        %vm724 = vcmp.lt.s32.totalorder %v717, %v704
        %v725 = vsel %vm724, %v717, %v704
        %vm726 = vcmp.lt.s32.totalorder %v719, %v705
        %v727 = vsel %vm726, %v719, %v705
        %vm728 = vcmp.lt.s32.totalorder %v721, %v706
        %v729 = vsel %vm728, %v721, %v706
        %vm730 = vcmp.lt.s32.totalorder %v723, %v707
        %v731 = vsel %vm730, %v723, %v707
        %vm732 = vcmp.lt.s32.totalorder %v725, %v727
        %v733 = vsel %vm732, %v725, %v727
        %vm734 = vcmp.lt.s32.totalorder %v729, %v731
        %v735 = vsel %vm734, %v729, %v731
        %vm736 = vcmp.lt.s32.totalorder %v733, %v735
        %v737 = vsel %vm736, %v733, %v735
        %v738 = vrot.slane %v737, 4
        %vm739 = vcmp.lt.s32.totalorder %v737, %v738
        %v740 = vsel %vm739, %v737, %v738
        %v741 = vrot.slane %v740, 2
        %vm742 = vcmp.lt.s32.totalorder %v740, %v741
        %v743 = vsel %vm742, %v740, %v741
        %v744 = vrot.slane %v743, 1
        %vm745 = vcmp.lt.s32.totalorder %v743, %v744
        %v746 = vsel %vm745, %v743, %v744
        %747 = vst [vmem:[%s283] sm:$0x1] %v746
        %v748 = vlaneseq
        %v749 = vand.u32 %v748, 127
        %s750 = smul.u32 %s26, 128
        %v751 = vstv %s750
        %v752 = vadd.s32 %v751, %v749
        %vm753 = vcmp.lt.s32.totalorder %v752, 8
        %v754 = vsel %vm753, 1, 0
        %v755 = vcvt.s32.f32 %v754
        %vm756 = vcmp.eq.s32.totalorder %v660, %v746
        %vm757 = vcmp.eq.s32.totalorder %v661, %v746
        %vm758 = vcmp.eq.s32.totalorder %v662, %v746
        %vm759 = vcmp.eq.s32.totalorder %v663, %v746
        %vm760 = vcmp.eq.s32.totalorder %v664, %v746
        %vm761 = vcmp.eq.s32.totalorder %v665, %v746
        %vm762 = vcmp.eq.s32.totalorder %v666, %v746
        %vm763 = vcmp.eq.s32.totalorder %v667, %v746
        %vm764 = vcmp.eq.s32.totalorder %v668, %v746
        %vm765 = vcmp.eq.s32.totalorder %v669, %v746
        %vm766 = vcmp.eq.s32.totalorder %v670, %v746
        %vm767 = vcmp.eq.s32.totalorder %v671, %v746
        %vm768 = vcmp.eq.s32.totalorder %v672, %v746
        %vm769 = vcmp.eq.s32.totalorder %v673, %v746
        %vm770 = vcmp.eq.s32.totalorder %v674, %v746
        %vm771 = vcmp.eq.s32.totalorder %v675, %v746
        %v772 = vsel %vm756, %v755, 0.0
        %v773 = vsel %vm757, %v755, 0.0
        %v774 = vsel %vm758, %v755, 0.0
        %v775 = vsel %vm759, %v755, 0.0
        %v776 = vsel %vm760, %v755, 0.0
        %v777 = vsel %vm761, %v755, 0.0
        %v778 = vsel %vm762, %v755, 0.0
        %v779 = vsel %vm763, %v755, 0.0
        %v780 = vsel %vm764, %v755, 0.0
        %v781 = vsel %vm765, %v755, 0.0
        %v782 = vsel %vm766, %v755, 0.0
        %v783 = vsel %vm767, %v755, 0.0
        %v784 = vsel %vm768, %v755, 0.0
        %v785 = vsel %vm769, %v755, 0.0
        %v786 = vsel %vm770, %v755, 0.0
        %v787 = vsel %vm771, %v755, 0.0
        %v788 = vld [vmem:[%s2] sm:$0xff]
        %v789 = vld [vmem:[%s2 + $0x8] sm:$0xff]
        %v790 = vld [vmem:[%s2 + $0x10] sm:$0xff]
        %v791 = vld [vmem:[%s2 + $0x18] sm:$0xff]
        %792 = vmatpush.msra.mxu0 %v787
        %793 = vmatpush.msra.mxu0 %v786
        %794 = vmatpush.msra.mxu0 %v785
        %795 = vmatpush.msra.mxu0 %v784
        %796 = vmatpush.msra.mxu0 %v783
        %797 = vmatpush.msra.mxu0 %v782
        %798 = vmatpush.msra.mxu0 %v781
        %799 = vmatpush.msra.mxu0 %v780
        %800 = vmatpush.msra.mxu0 %v779
        %801 = vmatpush.msra.mxu0 %v778
        %802 = vmatpush.msra.mxu0 %v777
        %803 = vmatpush.msra.mxu0 %v776
        %804 = vmatpush.msra.mxu0 %v775
        %805 = vmatpush.msra.mxu0 %v774
        %806 = vmatpush.msra.mxu0 %v773
        %807 = vmatpush.msra.mxu0 %v772
        %808 = vmatmul.f32.gmra.mxu0 %v788
        %v809 = vpop.f32.mrf.mxu0
        %v810 = vadd.f32 0.0, %v809
        %811 = vmatmul.f32.gmra.mxu0 %v789
        %v812 = vpop.f32.mrf.mxu0
        %v813 = vadd.f32 0.0, %v812
        %814 = vmatmul.f32.gmra.mxu0 %v790
        %v815 = vpop.f32.mrf.mxu0
        %v816 = vadd.f32 0.0, %v815
        %817 = vmatmul.f32.gmra.mxu0 %v791
        %v818 = vpop.f32.mrf.mxu0
        %v819 = vadd.f32 0.0, %v818
        %820 = vdwg.mxu0
        %821 = vst [vmem:[%s309] sm:$0xff] %v810
        %822 = vst [vmem:[%s309 + $0x8] sm:$0xff] %v813
        %823 = vst [vmem:[%s309 + $0x10] sm:$0xff] %v816
        %824 = vst [vmem:[%s309 + $0x18] sm:$0xff] %v819
        %v825 = vmul.f32 %v316, %v316
        %v826 = vmul.f32 %v317, %v317
        %v827 = vmul.f32 %v318, %v318
        %v828 = vmul.f32 %v319, %v319
        %v829 = vmul.f32 %v320, %v320
        %v830 = vmul.f32 %v321, %v321
        %v831 = vmul.f32 %v322, %v322
        %v832 = vmul.f32 %v323, %v323
        %v833 = vmul.f32 %v324, %v324
        %v834 = vmul.f32 %v325, %v325
        %v835 = vmul.f32 %v326, %v326
        %v836 = vmul.f32 %v327, %v327
        %v837 = vmul.f32 %v328, %v328
        %v838 = vmul.f32 %v329, %v329
        %v839 = vmul.f32 %v330, %v330
        %v840 = vmul.f32 %v331, %v331
        %v841 = vsel %vm364, %v825, 0.0
        %v842 = vsel %vm364, %v826, 0.0
        %v843 = vadd.f32 %v841, %v842
        %v844 = vsel %vm364, %v827, 0.0
        %v845 = vadd.f32 %v843, %v844
        %v846 = vsel %vm364, %v828, 0.0
        %v847 = vadd.f32 %v845, %v846
        %v848 = vsel %vm364, %v829, 0.0
        %v849 = vadd.f32 %v847, %v848
        %v850 = vsel %vm364, %v830, 0.0
        %v851 = vadd.f32 %v849, %v850
        %v852 = vsel %vm364, %v831, 0.0
        %v853 = vadd.f32 %v851, %v852
        %v854 = vsel %vm364, %v832, 0.0
        %v855 = vadd.f32 %v853, %v854
        %v856 = vsel %vm364, %v833, 0.0
        %v857 = vadd.f32 %v855, %v856
        %v858 = vsel %vm364, %v834, 0.0
        %v859 = vadd.f32 %v857, %v858
        %v860 = vsel %vm364, %v835, 0.0
        %v861 = vadd.f32 %v859, %v860
        %v862 = vsel %vm364, %v836, 0.0
        %v863 = vadd.f32 %v861, %v862
        %v864 = vsel %vm364, %v837, 0.0
        %v865 = vadd.f32 %v863, %v864
        %v866 = vsel %vm364, %v838, 0.0
        %v867 = vadd.f32 %v865, %v866
        %v868 = vsel %vm364, %v839, 0.0
        %v869 = vadd.f32 %v867, %v868
        %v870 = vsel %vm364, %v840, 0.0
        %v871 = vadd.f32 %v869, %v870
        %872 = vadd.xlane.f32.xlu0 %v871
        %v873 = vpop.xlane.xlu0 %872
        %v874 = vrot.slane %v873, 4
        %v875 = vadd.f32 %v873, %v874
        %v876 = vrot.slane %v875, 2
        %v877 = vadd.f32 %v875, %v876
        %v878 = vrot.slane %v877, 1
        %v879 = vadd.f32 %v877, %v878
        %s880 = vtos %v879
        %v881 = vmul.f32 %v658, %v755
        %vm882 = vcmask 1040384
        %v883 = vsel %vm882, %v881, 0.0
        %884 = vadd.xlane.f32.xlu0 %v883
        %v885 = vpop.xlane.xlu0 %884
        %v886 = vrot.slane %v885, 4
        %v887 = vadd.f32 %v885, %v886
        %v888 = vrot.slane %v887, 2
        %v889 = vadd.f32 %v887, %v888
        %v890 = vrot.slane %v889, 1
        %v891 = vadd.f32 %v889, %v890
        %s892 = vtos %v891
        %s893 = sadd.f32 %s880, %s892
        %vm894 = vcmp.eq.s32.totalorder %v749, 0
        %v895 = vstv %s893
        %v896 = vsel %vm894, %v895, 0.0
        %897 = vst [vmem:[%s315] sm:$0x1] %v896
        %p898 = scmp.lt.s32.totalorder %s25, 1
        %s899 = scalar_select %p898, %s25, 1
        %p900 = scmp.lt.s32.totalorder %s26, 0
        %s901 = scalar_select %p900, %s26, 0
        %s902 = smul.addr %s899, 4
        %s903 = sadd.s32 %s901, %s902
        %s904 = smul.addr %s903, 8
        %s905 = scalar_lea.vmem %s4, %s904
        %s906 = sand.u32 %s162, 1
        %s907 = scalar_lea.sflag [#allocation3], %s906
        %s908 = sand.u32 %s162, 1
        %s909 = scalar_lea.vmem [#allocation2], %s908
        %p910 = scmp.lt.s32.totalorder %s25, 1
        %s911 = scalar_select %p910, %s25, 1
        %p912 = scmp.lt.s32.totalorder %s26, 0
        %s913 = scalar_select %p912, %s26, 0
        %s914 = sadd.s32 %s913, %s911
        %s915 = scalar_lea.vmem %s6, %s914
        // Predicated region
        $region37: #{vector_quantize.1} parent=35 // pred_check
          %p916 = pneg %p144
        $region38: #{vector_quantize.1} parent=35 // pred_check_branch
          %918 = sbr.rel (%p916) target = $region40
        $region39: #{vector_quantize.1} parent=35 // pred_region
          _
        $region40: #{vector_quantize.1} parent=35 // pred_fallthru
          _
        // Predicated region
        $region41: #{vector_quantize.1} parent=35 // pred_check
          %p919 = pneg %p172
        $region42: #{vector_quantize.1} parent=35 // pred_check_branch
          %921 = sbr.rel (%p919) target = $region44
        $region43: #{vector_quantize.1} parent=35 // pred_region
          %923 = vsyncadd %s907, 0
          %s924 = sadd.s32 %s26, %s25
          %s925 = scalar_lea.hbm %s5, %s924
          %s927 = sshll.u32 %s909, 4
          %s928 = int_to_ptr.vmem [resolvable:$true] %s927
          %s929 = sshll.u32 %s925, 4
          %s930 = int_to_ptr.hbm [resolvable:$true] %s929
          %932 = dma.vmem_to_hbm [thread:$0]  %s928, 16, %s930, %s907
        $region44: #{vector_quantize.1} parent=35 // pred_fallthru
          _
        // Predicated region
        $region45: #{vector_quantize.1} parent=35 // pred_check
          %p933 = pneg %p200
        $region46: #{vector_quantize.1} parent=35 // pred_check_branch
          %935 = sbr.rel (%p933) target = $region48
        $region47: #{vector_quantize.1} parent=35 // pred_region
          _
        $region48: #{vector_quantize.1} parent=35 // pred_fallthru
          _
      $region36: #{vector_quantize.1} parent=5 // pred_fallthru
        _
      %p936 = scmp.le.s32.totalorder 2, %s16
      // Predicated region
      $region49: #{vector_quantize.1} parent=5 // pred_check
        %p937 = pneg %p936
      $region50: #{vector_quantize.1} parent=5 // pred_check_branch
        %939 = sbr.rel (%p937) target = $region52
      $region51: #{vector_quantize.1} parent=5 // pred_region
        %s940 = ssub.s32 %s16, 2
        // Predicated region
        $region53: #{vector_quantize.1} parent=51 // pred_check
          %p941 = pneg %p150
        $region54: #{vector_quantize.1} parent=51 // pred_check_branch
          %943 = sbr.rel (%p941) target = $region56
        $region55: #{vector_quantize.1} parent=51 // pred_region
          %p944 = scmp.lt.s32.totalorder %s27, 1
          %s945 = scalar_select %p944, %s27, 1
          %p946 = scmp.lt.s32.totalorder %s28, 0
          %s947 = scalar_select %p946, %s28, 0
          %s948 = smul.addr %s945, 4
          %s949 = sadd.s32 %s947, %s948
          %s950 = smul.addr %s949, 8
          %s951 = scalar_lea.vmem %s4, %s950
        $region56: #{vector_quantize.1} parent=51 // pred_fallthru
          _
        // Predicated region
        $region57: #{vector_quantize.1} parent=51 // pred_check
          %p952 = pneg %p178
        $region58: #{vector_quantize.1} parent=51 // pred_check_branch
          %954 = sbr.rel (%p952) target = $region60
        $region59: #{vector_quantize.1} parent=51 // pred_region
          %s955 = sand.u32 %s163, 1
          %s956 = scalar_lea.sflag [#allocation3], %s955
          %s957 = sand.u32 %s163, 1
          %s958 = scalar_lea.vmem [#allocation2], %s957
          %960 = dma.done %s956, 16
        $region60: #{vector_quantize.1} parent=51 // pred_fallthru
          _
        // Predicated region
        $region61: #{vector_quantize.1} parent=51 // pred_check
          %p961 = pneg %p206
        $region62: #{vector_quantize.1} parent=51 // pred_check_branch
          %963 = sbr.rel (%p961) target = $region64
        $region63: #{vector_quantize.1} parent=51 // pred_region
          %p964 = scmp.lt.s32.totalorder %s27, 1
          %s965 = scalar_select %p964, %s27, 1
          %p966 = scmp.lt.s32.totalorder %s28, 0
          %s967 = scalar_select %p966, %s28, 0
          %s968 = sadd.s32 %s967, %s965
          %s969 = scalar_lea.vmem %s6, %s968
        $region64: #{vector_quantize.1} parent=51 // pred_fallthru
          _
      $region52: #{vector_quantize.1} parent=5 // pred_fallthru
        _
    $region6: #{vector_quantize.1} parent=1 // loop_footer
      %s20 = sadd.s32 1, %s16
    $region7: #{vector_quantize.1} parent=1 // loop_footer_branch
      %15 = sbr.rel target = $region3
    $region8: #{vector_quantize.1} parent=1 // loop_exit
      _
    %970 = vsyncpa [#allocation3], 1
    %s971 = scalar_lea.sflag [#allocation3], 1
    %972 = vsyncpa %s971, 1

</llo_original>
